<compile_context>
chip_gen: v6e
topology: v6e:2x2x1
jax: 0.10.0
libtpu: 0.0.40
codegen_flags: <defaults>
</compile_context>

<pallas_src>
import math

import jax
import jax.numpy as jnp
from jax.experimental import pallas as pl
from jax.experimental.pallas import tpu as pltpu


def _build_pe(d_model: int, max_seq_length: int) -> jnp.ndarray:
    """Deterministic sinusoidal positional-encoding buffer, shape (max_seq_length, d_model)."""
    position = jnp.arange(max_seq_length, dtype=jnp.float32)[:, None]            # (L, 1)
    div_term = jnp.exp(
        jnp.arange(0, d_model, 2, dtype=jnp.float32) * -(math.log(10000.0) / d_model)
    )                                                                              # (D/2,)
    angles = position * div_term                                                   # (L, D/2)
    pe = jnp.zeros((max_seq_length, d_model), dtype=jnp.float32)
    pe = pe.at[:, 0::2].set(jnp.sin(angles))
    pe = pe.at[:, 1::2].set(jnp.cos(angles))
    return pe


def _add_pe_kernel(x_ref, pe_ref, o_ref):
    # x_ref / o_ref: (tB, tS, D) tile; pe_ref: (tS, D) tile broadcast over the batch tile.
    o_ref[...] = x_ref[...] + pe_ref[...][None, :, :]


def _round_up(n: int, m: int) -> int:
    return ((n + m - 1) // m) * m


def _pick_tiles(B: int, S: int, D: int, dtype, target_bytes: int = 4 << 20):
    """Pick (tB, tS): ~target_bytes per x tile, dtype-aware sublane alignment, and
    >=2 sequence tiles when possible so the outer (megacore-sharded) axis has work."""
    itemsize = jnp.dtype(dtype).itemsize
    sub = max(8, 32 // itemsize)                       # sublane packing: 8 f32, 16 bf16, 32 int8/fp8
    row_bytes = max(1, D * itemsize)
    budget_rows = max(sub, target_bytes // row_bytes)  # (batch*seq) rows per block

    if S > budget_rows:
        # Tile the sequence axis; keep tS packing-aligned. cdiv grid handles the ragged tail.
        tS = max(sub, (budget_rows // sub) * sub)
    elif S >= 2 * sub:
        # Whole sequence fits one block: split into two aligned S-tiles for v7x megacore.
        tS = _round_up(pl.cdiv(S, 2), sub)
        if tS >= S:
            tS = S
    else:
        tS = S                                          # full-dim block (always legal for x)

    tB = max(1, min(B, budget_rows // max(1, tS)))      # fold batch rows into the block
    return tB, tS


def positional_encoding_forward(x: jnp.ndarray, pe: jnp.ndarray) -> jnp.ndarray:
    """x: (B, S, D), pe: (max_seq_length, D)  ->  (B, S, D) in x.dtype."""
    B, S, D = x.shape
    max_seq, d_model = pe.shape
    if S > max_seq:
        raise ValueError(f"sequence length {S} exceeds max_seq_length {max_seq}")
    if D != d_model:
        raise ValueError(f"d_model mismatch: x has {D}, pe has {d_model}")

    # One-time cast outside the kernel: halves pe DMA bytes for bf16/fp8 activations
    # and makes the in-kernel add a pure same-dtype vadd.
    if pe.dtype != x.dtype:
        pe = pe.astype(x.dtype)

    itemsize = jnp.dtype(x.dtype).itemsize
    sub = max(8, 32 // itemsize)
    tB, tS = _pick_tiles(B, S, D, x.dtype)

    # Corner case: tiny/unaligned S forces tS == S, which is a full-dim block for x but
    # not for pe (whose full dim is max_seq). Slice pe to (S, D) so the pe block equals
    # its full dim; the copy is only S*D elements and only happens in this corner case.
    if tS == S and (S % sub != 0) and (S != max_seq):
        pe = pe[:S]

    num_s = pl.cdiv(S, tS)
    num_b = pl.cdiv(B, tB)

    return pl.pallas_call(
        _add_pe_kernel,
        out_shape=jax.ShapeDtypeStruct((B, S, D), x.dtype),
        grid_spec=pltpu.PrefetchScalarGridSpec(
            num_scalar_prefetch=0,
            # Seq-tiles outer, batch inner: the pe block index (s, 0) is constant across
            # the inner batch loop, so the pe tile is not re-DMA'd per batch step.
            grid=(num_s, num_b),
            in_specs=[
                pl.BlockSpec((tB, tS, D), lambda s, b: (b, s, 0)),  # x tile
                pl.BlockSpec((tS, D), lambda s, b: (s, 0)),         # pe window into the full buffer
            ],
            out_specs=pl.BlockSpec((tB, tS, D), lambda s, b: (b, s, 0)),
        ),
        compiler_params=pltpu.CompilerParams(
            # Pure elementwise add, no carried state -> both axes megacore-shardable.
            dimension_semantics=("parallel", "parallel"),
            # Explicit budget: peak ~ 2*(x + out + pe) tiles ~ 24 MiB with 4 MiB tiles;
            # 48 MiB is under v7x's 64 MiB physical VMEM and above v5e's 16 MiB default.
            vmem_limit_bytes=48 << 20,
        ),
    )(x, pe)


class PositionalEncoding:
    """JAX/Pallas port of the PyTorch PositionalEncoding module."""

    def __init__(self, d_model: int, max_seq_length: int):
        self.pe = _build_pe(d_model, max_seq_length)  # (max_seq_length, d_model), f32

    def __call__(self, x: jnp.ndarray) -> jnp.ndarray:
        return positional_encoding_forward(x, self.pe)


if __name__ == "__main__":
    # Small, lane-dense demo shape (D multiple of 128 keeps output stores unmasked).
    B, S, D = 2, 8, 128
    MAX_SEQ = 16

    key = jax.random.PRNGKey(0)
    x = jax.random.normal(key, (B, S, D), dtype=jnp.float32)

    module = PositionalEncoding(d_model=D, max_seq_length=MAX_SEQ)
    out = module(x)
    out = jax.block_until_ready(out)

    # Correctness check against plain-JAX reference.
    ref = x + module.pe[None, :S, :].astype(x.dtype)
    assert out.shape == (B, S, D)
    assert jnp.allclose(out, ref, atol=1e-6), "mismatch vs reference"

    print("KERNEL_OK")
</pallas_src>

<mosaic_0001>
module attributes {stable_mosaic.version = 11 : i64} {
  func.func @_add_pe_kernel(%arg0: i32, %arg1: i32, %arg2: memref<2x8x128xf32, #tpu.memory_space<vmem>>, %arg3: memref<8x128xf32, #tpu.memory_space<vmem>>, %arg4: memref<2x8x128xf32, #tpu.memory_space<vmem>>) attributes {dimension_semantics = [#tpu.dimension_semantics<parallel>, #tpu.dimension_semantics<parallel>], iteration_bounds = array<i64: 1, 1>, scalar_prefetch = 0 : i64, scratch_operands = 0 : i64, tpu.core_type = #tpu.core_type<tc>, window_params = [{transform_indices = @transform_0, window_bounds = array<i64: 2, 8, 128>}, {transform_indices = @transform_1, window_bounds = array<i64: 8, 128>}, {transform_indices = @transform_2, window_bounds = array<i64: 2, 8, 128>}]} {
    %c0 = arith.constant 0 : index
    %c0_0 = arith.constant 0 : index
    %c0_1 = arith.constant 0 : index
    %0 = vector.load %arg2[%c0, %c0_0, %c0_1] : memref<2x8x128xf32, #tpu.memory_space<vmem>>, vector<2x8x128xf32>
    %c0_2 = arith.constant 0 : index
    %c0_3 = arith.constant 0 : index
    %1 = vector.load %arg3[%c0_2, %c0_3] : memref<8x128xf32, #tpu.memory_space<vmem>>, vector<8x128xf32>
    %2 = vector.shape_cast %1 : vector<8x128xf32> to vector<1x8x128xf32>
    %3 = vector.broadcast %2 : vector<1x8x128xf32> to vector<2x8x128xf32>
    %4 = arith.addf %0, %3 : vector<2x8x128xf32>
    %c0_4 = arith.constant 0 : index
    %c0_5 = arith.constant 0 : index
    %c0_6 = arith.constant 0 : index
    %5 = vector.load %arg4[%c0_4, %c0_5, %c0_6] : memref<2x8x128xf32, #tpu.memory_space<vmem>>, vector<2x8x128xf32>
    tpu.vector_store %arg4[%c0_4, %c0_5, %c0_6], %4 {strides = array<i32>} : memref<2x8x128xf32, #tpu.memory_space<vmem>>, vector<2x8x128xf32>,
    return
  }
  func.func @transform_0(%arg0: i32, %arg1: i32) -> (i32, i32, i32) {
    %c0_i32 = arith.constant 0 : i32
    %c0_i32_0 = arith.constant 0 : i32
    return %arg1, %arg0, %c0_i32 : i32, i32, i32
  }
  func.func @transform_1(%arg0: i32, %arg1: i32) -> (i32, i32) {
    %c0_i32 = arith.constant 0 : i32
    %c0_i32_0 = arith.constant 0 : i32
    return %arg0, %c0_i32 : i32, i32
  }
  func.func @transform_2(%arg0: i32, %arg1: i32) -> (i32, i32, i32) {
    %c0_i32 = arith.constant 0 : i32
    %c0_i32_0 = arith.constant 0 : i32
    return %arg1, %arg0, %c0_i32 : i32, i32, i32
  }
}

</mosaic_0001>

<llo_original>
// kernel: tpu_custom_call.1
$region0: #{tpu_custom_call.1}
  #allocation0 [shape = 'u32[]', space=smem, size = 0x4, offset = 0x4, fixed_abs, tag = 'smem constant byte address 0x4 - core index']
  #allocation1 [shape = 'u32[144,128]{1,0:T(1,128)}', space=vmem, size = 0x12000, scoped, tag = 'internal scratch']
  %s0 = inlined_call_operand.hbm [shape: f32[2,8,128], index: 0, kind: input, shape index: {}]
  %s1 = inlined_call_operand.hbm [shape: f32[16,128], index: 1, kind: input, shape index: {}]
  %s2 = inlined_call_operand.hbm [shape: f32[2,8,128], index: 2, kind: output, shape index: {}]
  %s3 = sld [smem:[#allocation0]]
  $region26: #{tpu_custom_call.1} parent=0
    _
  %s5 = ssub.s32 1, %s3
  %s6 = scalar_select 0, %s5, %s3
  $region1: #{tpu_custom_call.1} parent=0
    #allocation2 [shape = 'u8[8192]{0}', space=vmem, size = 0x2000, scoped, tag = 'input window, operand 0, single buffered']
    #allocation3 [shape = 's32[1]{0}', space=sflag, size = 0x4, scoped, tag = 'scoped memory for tpu_custom_call.1']
    #allocation4 [shape = 's32[1]{0}', space=sflag, size = 0x4, scoped, tag = 'scoped memory for tpu_custom_call.1']
    #allocation5 [shape = 'u8[4096]{0}', space=vmem, size = 0x1000, scoped, tag = 'input window, operand 1, single buffered']
    #allocation6 [shape = 's32[1]{0}', space=sflag, size = 0x4, scoped, tag = 'scoped memory for tpu_custom_call.1']
    #allocation7 [shape = 'u8[8192]{0}', space=vmem, size = 0x2000, scoped, tag = 'output window, operand 0, single buffered']
    %7 = vsyncpa [#allocation3], 0
    %8 = vsyncpa [#allocation6], 0
    %9 = vsyncpa [#allocation4], 0
    // Predicated region
    $region2: #{tpu_custom_call.1} parent=1 // pred_check
      _
    $region3: #{tpu_custom_call.1} parent=1 // pred_check_branch
      %11 = sbr.rel (0) target = $region5
    $region4: #{tpu_custom_call.1} parent=1 // pred_region
      %s13 = ssub.s32 256, 256
      %14 = vsyncadd [#allocation3], %s13
      %s15 = sshll.u32 [#allocation2], 4
      %s16 = int_to_ptr.vmem [resolvable:$true] %s15
      %21 = dma.hbm_to_vmem [thread:$0]  %s0, 256, %s16, [#allocation3], 128, 128, 8
    $region5: #{tpu_custom_call.1} parent=1 // pred_fallthru
      _
    // Predicated region
    $region6: #{tpu_custom_call.1} parent=1 // pred_check
      _
    $region7: #{tpu_custom_call.1} parent=1 // pred_check_branch
      %23 = sbr.rel (0) target = $region9
    $region8: #{tpu_custom_call.1} parent=1 // pred_region
      %s25 = ssub.s32 128, 128
      %26 = vsyncadd [#allocation6], %s25
      %s28 = sshll.u32 [#allocation5], 4
      %s29 = int_to_ptr.vmem [resolvable:$true] %s28
      %31 = dma.hbm_to_vmem [thread:$0]  %s1, 128, %s29, [#allocation6]
    $region9: #{tpu_custom_call.1} parent=1 // pred_fallthru
      _
    // Predicated region
    $region10: #{tpu_custom_call.1} parent=1 // pred_check
      _
    $region11: #{tpu_custom_call.1} parent=1 // pred_check_branch
      %33 = sbr.rel (0) target = $region13
    $region12: #{tpu_custom_call.1} parent=1 // pred_region
      %34 = dma.done [#allocation3], 256
    $region13: #{tpu_custom_call.1} parent=1 // pred_fallthru
      _
    // Predicated region
    $region14: #{tpu_custom_call.1} parent=1 // pred_check
      _
    $region15: #{tpu_custom_call.1} parent=1 // pred_check_branch
      %36 = sbr.rel (0) target = $region17
    $region16: #{tpu_custom_call.1} parent=1 // pred_region
      %37 = dma.done [#allocation6], 128
    $region17: #{tpu_custom_call.1} parent=1 // pred_fallthru
      _
    %v38 = vld [vmem:[#allocation2] sm:$0xff]
    %v39 = vld [vmem:[#allocation2 + $0x8] sm:$0xff]
    %v40 = vld [vmem:[#allocation5] sm:$0xff]
    %v41 = vadd.f32 %v38, %v40
    %v42 = vadd.f32 %v39, %v40
    %43 = vst [vmem:[#allocation7] sm:$0xff] %v41
    %44 = vst [vmem:[#allocation7 + $0x8] sm:$0xff] %v42
    // Predicated region
    $region18: #{tpu_custom_call.1} parent=1 // pred_check
      _
    $region19: #{tpu_custom_call.1} parent=1 // pred_check_branch
      %46 = sbr.rel (0) target = $region21
    $region20: #{tpu_custom_call.1} parent=1 // pred_region
      %s48 = ssub.s32 256, 256
      %49 = vsyncadd [#allocation4], %s48
      %s50 = sshll.u32 [#allocation7], 4
      %s51 = int_to_ptr.vmem [resolvable:$true] %s50
      %56 = dma.vmem_to_hbm [thread:$0]  %s51, 256, %s2, [#allocation4], 128, 128, 8
    $region21: #{tpu_custom_call.1} parent=1 // pred_fallthru
      _
    // Predicated region
    $region22: #{tpu_custom_call.1} parent=1 // pred_check
      _
    $region23: #{tpu_custom_call.1} parent=1 // pred_check_branch
      %58 = sbr.rel (0) target = $region25
    $region24: #{tpu_custom_call.1} parent=1 // pred_region
      %59 = dma.done [#allocation4], 256
    $region25: #{tpu_custom_call.1} parent=1 // pred_fallthru
      _
    %60 = vsyncpa [#allocation3], 1
    %61 = vsyncpa [#allocation6], 1
    %62 = vsyncpa [#allocation4], 1

</llo_original>
